<compile_context>
chip_gen: v7x
topology: tpu7x:2x2x1
jax: 0.10.0
libtpu: 0.0.40
codegen_flags: <defaults>
</compile_context>

<pallas_src>
import jax
import jax.numpy as jnp
from jax.experimental import pallas as pl
from jax.experimental.pallas import tpu as pltpu


def _query_reduce_kernel(q_ref, wqt_ref, bq_ref, wre_ref, o_ref):
    # q_ref:   (B, D)        query embeddings
    # wqt_ref: (D, D*H)      query_projection.weight^T
    # bq_ref:  (1, D*H)      query_projection.bias
    # wre_ref: (D*H, D)      block-diagonal expansion of reduce_projection.weight
    # o_ref:   (B, D)        q_red
    q = q_ref[...].astype(jnp.float32)
    wqt = wqt_ref[...].astype(jnp.float32)
    bq = bq_ref[...].astype(jnp.float32)
    wre = wre_ref[...].astype(jnp.float32)

    pq = jnp.tanh(jnp.dot(q, wqt, preferred_element_type=jnp.float32) + bq)  # (B, D*H)
    q_red = jnp.dot(pq, wre, preferred_element_type=jnp.float32)             # (B, D)
    o_ref[...] = q_red.astype(o_ref.dtype)


def _review_attention_kernel(x_ref, qred_ref, o_ref):
    # x_ref:    (B_TILE, R, D) reviews
    # qred_ref: (B_TILE, 1, D) reduced query
    # o_ref:    (B_TILE, 1, D) entity embedding
    # NOTE: test inputs are f32 so the cast below is a no-op; for bf16 inputs
    # the large tile could stay bf16 on v6e/v7x with f32 accumulation only.
    x = x_ref[...].astype(jnp.float32)        # (BT, R, D)
    qr = qred_ref[...]                        # (BT, 1, D) f32

    # score[b, r] = sum_i x[b, r, i] * q_red[b, i]  (VPU multiply + lane reduce)
    s = jnp.sum(x * qr, axis=-1, keepdims=True)          # (BT, R, 1)

    # softmax over the review axis (axis=1 == PyTorch dim=1)
    m = jnp.max(s, axis=1, keepdims=True)                # (BT, 1, 1)
    e = jnp.exp(s - m)                                   # (BT, R, 1)
    denom = jnp.sum(e, axis=1, keepdims=True)            # (BT, 1, 1)
    p = e * pl.reciprocal(denom, approx=True)            # EUP reciprocal

    # weighted sum over reviews (VPU multiply + sublane reduce)
    out = jnp.sum(p * x, axis=1, keepdims=True)          # (BT, 1, D)
    o_ref[...] = out.astype(o_ref.dtype)


def _pick_batch_tile(b, r, d, itemsize, vmem_budget_bytes=4 << 20):
    """Batch tile for stage 2: as big as the VMEM budget allows (double-buffered),
    but leave the parallel grid >= 2 so v7x can shard across both TensorCores."""
    per_batch = max(1, r * d * itemsize)
    tile = max(1, min(b, vmem_budget_bytes // per_batch))
    if b >= 2:
        tile = min(tile, pl.cdiv(b, 2))
    return int(tile)


def attention_layer(reviews_embedding, query_embedding, wq, bq, wr):
    """
    reviews_embedding: (B, R, D)
    query_embedding:   (B, D) or (B, 1, D)
    wq: (D*H, D)  query_projection.weight
    bq: (D*H,)    query_projection.bias
    wr: (1, H)    reduce_projection.weight (no bias)
    returns:      (B, D)
    """
    b, r, d = reviews_embedding.shape
    dh, d_in = wq.shape
    h = dh // d
    assert d_in == d and wr.shape == (1, h) and bq.shape == (dh,)

    f32 = jnp.float32
    query2d = query_embedding.reshape(b, d).astype(f32)
    wqt = jnp.asarray(wq, f32).T                         # (D, D*H)
    bq2 = jnp.asarray(bq, f32).reshape(1, dh)            # (1, D*H)
    # Block-diagonal expansion: wre[i*H + h, i'] = wr[0, h] * (i == i')
    wre = (jnp.eye(d, dtype=f32)[:, None, :] *
           jnp.asarray(wr, f32).reshape(1, h, 1)).reshape(dh, d)

    # ---- Stage 1: reduced query, q_red (B, D). Tiny; full blocks, one step.
    # (For very large B / D*H this stage should also be tiled over batch.)
    q_red = pl.pallas_call(
        _query_reduce_kernel,
        out_shape=jax.ShapeDtypeStruct((b, d), f32),
        grid_spec=pltpu.PrefetchScalarGridSpec(
            num_scalar_prefetch=0,
            grid=(1,),
            in_specs=[
                pl.BlockSpec((b, d), lambda i: (0, 0)),
                pl.BlockSpec((d, dh), lambda i: (0, 0)),
                pl.BlockSpec((1, dh), lambda i: (0, 0)),
                pl.BlockSpec((dh, d), lambda i: (0, 0)),
            ],
            out_specs=pl.BlockSpec((b, d), lambda i: (0, 0)),
        ),
    )(query2d, wqt, bq2, wre)

    # ---- Stage 2: softmax attention over reviews, blocked over batch.
    itemsize = jnp.dtype(reviews_embedding.dtype).itemsize
    b_tile = _pick_batch_tile(b, r, d, itemsize)
    n_tiles = pl.cdiv(b, b_tile)
    b_pad = n_tiles * b_tile

    x = reviews_embedding
    qr3 = q_red.reshape(b, 1, d)
    if b_pad != b:
        # zero padding keeps exp() finite in padded rows; they are sliced off below
        x = jnp.pad(x, ((0, b_pad - b), (0, 0), (0, 0)))
        qr3 = jnp.pad(qr3, ((0, b_pad - b), (0, 0), (0, 0)))

    out = pl.pallas_call(
        _review_attention_kernel,
        out_shape=jax.ShapeDtypeStruct((b_pad, 1, d), reviews_embedding.dtype),
        grid_spec=pltpu.PrefetchScalarGridSpec(
            num_scalar_prefetch=0,
            grid=(n_tiles,),
            in_specs=[
                pl.BlockSpec((b_tile, r, d), lambda i: (i, 0, 0)),
                pl.BlockSpec((b_tile, 1, d), lambda i: (i, 0, 0)),
            ],
            out_specs=pl.BlockSpec((b_tile, 1, d), lambda i: (i, 0, 0)),
        ),
        compiler_params=pltpu.CompilerParams(
            dimension_semantics=("parallel",),
        ),
        cost_estimate=pl.CostEstimate(
            flops=4 * b_pad * r * d + 6 * b_pad * r,
            transcendentals=b_pad * r + b_pad,
            bytes_accessed=b_pad * r * d * itemsize + 2 * b_pad * d * 4,
        ),
    )(x, qr3)

    return out.reshape(b_pad, d)[:b]


def _reference(reviews, query, wq, bq, wr):
    # Pure-JAX mirror of the PyTorch forward.
    b, _, d = reviews.shape
    h = wr.shape[-1]
    pq = jnp.tanh(query.reshape(b, d) @ wq.T + bq)        # (B, D*H)
    pq = pq.reshape(b, d, h)                              # (B, D, H)
    dotted = jnp.einsum("bri,bih->brh", reviews, pq)      # (B, R, H)
    reduced = dotted @ wr.T                               # (B, R, 1)
    w = jax.nn.softmax(reduced, axis=1)
    return jnp.sum(w * reviews, axis=1)                   # (B, D)


if __name__ == "__main__":
    key = jax.random.PRNGKey(0)
    k_r, k_q, k_wq, k_bq, k_wr = jax.random.split(key, 5)

    batch, review_num, input_dim, hidden_dim = 4, 8, 32, 16

    reviews = jax.random.normal(
        k_r, (batch, review_num, input_dim), dtype=jnp.float32)
    query = jax.random.normal(k_q, (batch, input_dim), dtype=jnp.float32)

    # xavier-normal style init for the projections, uniform(0, 0.01) bias
    std_q = (2.0 / (input_dim + input_dim * hidden_dim)) ** 0.5
    wq = std_q * jax.random.normal(
        k_wq, (input_dim * hidden_dim, input_dim), dtype=jnp.float32)
    bq = jax.random.uniform(
        k_bq, (input_dim * hidden_dim,), jnp.float32, 0.0, 0.01)
    std_r = (2.0 / (hidden_dim + 1)) ** 0.5
    wr = std_r * jax.random.normal(k_wr, (1, hidden_dim), dtype=jnp.float32)

    out = jax.jit(attention_layer)(reviews, query, wq, bq, wr)
    out = jax.block_until_ready(out)

    ref = _reference(reviews, query, wq, bq, wr)
    assert out.shape == (batch, input_dim)
    # slightly loose tolerance: softmax normalization uses the EUP approximate
    # reciprocal (pl.reciprocal(..., approx=True))
    assert jnp.allclose(out, ref, atol=2e-3, rtol=2e-3), float(
        jnp.max(jnp.abs(out - ref)))

    print("KERNEL_OK")
</pallas_src>

<mosaic_0001>
module attributes {stable_mosaic.version = 11 : i64} {
  func.func @_query_reduce_kernel(%arg0: i32, %arg1: memref<4x32xf32, #tpu.memory_space<vmem>>, %arg2: memref<32x512xf32, #tpu.memory_space<vmem>>, %arg3: memref<1x512xf32, #tpu.memory_space<vmem>>, %arg4: memref<512x32xf32, #tpu.memory_space<vmem>>, %arg5: memref<4x32xf32, #tpu.memory_space<vmem>>) attributes {dimension_semantics = [#tpu.dimension_semantics<arbitrary>], iteration_bounds = array<i64: 1>, scalar_prefetch = 0 : i64, scratch_operands = 0 : i64, tpu.core_type = #tpu.core_type<tc>, window_params = [{pipeline_mode = #tpu.pipeline_mode<synchronous>, transform_indices = @transform_0, window_bounds = array<i64: 4, 32>}, {pipeline_mode = #tpu.pipeline_mode<synchronous>, transform_indices = @transform_1, window_bounds = array<i64: 32, 512>}, {pipeline_mode = #tpu.pipeline_mode<synchronous>, transform_indices = @transform_2, window_bounds = array<i64: 1, 512>}, {pipeline_mode = #tpu.pipeline_mode<synchronous>, transform_indices = @transform_3, window_bounds = array<i64: 512, 32>}, {pipeline_mode = #tpu.pipeline_mode<synchronous>, transform_indices = @transform_4, window_bounds = array<i64: 4, 32>}]} {
    %c0 = arith.constant 0 : index
    %c0_0 = arith.constant 0 : index
    %0 = vector.load %arg1[%c0, %c0_0] : memref<4x32xf32, #tpu.memory_space<vmem>>, vector<4x32xf32>
    %c0_1 = arith.constant 0 : index
    %c0_2 = arith.constant 0 : index
    %1 = vector.load %arg2[%c0_1, %c0_2] : memref<32x512xf32, #tpu.memory_space<vmem>>, vector<32x512xf32>
    %c0_3 = arith.constant 0 : index
    %c0_4 = arith.constant 0 : index
    %2 = vector.load %arg3[%c0_3, %c0_4] : memref<1x512xf32, #tpu.memory_space<vmem>>, vector<1x512xf32>
    %c0_5 = arith.constant 0 : index
    %c0_6 = arith.constant 0 : index
    %3 = vector.load %arg4[%c0_5, %c0_6] : memref<512x32xf32, #tpu.memory_space<vmem>>, vector<512x32xf32>
    %cst = arith.constant dense<0.000000e+00> : vector<4x512xf32>
    %4 = tpu.matmul %0, %1, %cst {dimension_numbers = #tpu.dot_dimension_numbers<[1], [0], [0], [1], [0, 0, 1, 1], [], []>} : vector<4x32xf32>, vector<32x512xf32>, vector<4x512xf32> -> vector<4x512xf32>
    %5 = vector.broadcast %2 : vector<1x512xf32> to vector<4x512xf32>
    %6 = arith.addf %4, %5 : vector<4x512xf32>
    %7 = math.tanh %6 : vector<4x512xf32>
    %cst_7 = arith.constant dense<0.000000e+00> : vector<4x32xf32>
    %8 = tpu.matmul %7, %3, %cst_7 {dimension_numbers = #tpu.dot_dimension_numbers<[1], [0], [0], [1], [0, 0, 1, 1], [], []>} : vector<4x512xf32>, vector<512x32xf32>, vector<4x32xf32> -> vector<4x32xf32>
    %c0_8 = arith.constant 0 : index
    %c0_9 = arith.constant 0 : index
    %9 = vector.load %arg5[%c0_8, %c0_9] : memref<4x32xf32, #tpu.memory_space<vmem>>, vector<4x32xf32>
    tpu.vector_store %arg5[%c0_8, %c0_9], %8 {strides = array<i32>} : memref<4x32xf32, #tpu.memory_space<vmem>>, vector<4x32xf32>,
    return
  }
  func.func @transform_0(%arg0: i32) -> (i32, i32) {
    %c0_i32 = arith.constant 0 : i32
    %c0_i32_0 = arith.constant 0 : i32
    %c0_i32_1 = arith.constant 0 : i32
    return %c0_i32, %c0_i32_0 : i32, i32
  }
  func.func @transform_1(%arg0: i32) -> (i32, i32) {
    %c0_i32 = arith.constant 0 : i32
    %c0_i32_0 = arith.constant 0 : i32
    %c0_i32_1 = arith.constant 0 : i32
    return %c0_i32, %c0_i32_0 : i32, i32
  }
  func.func @transform_2(%arg0: i32) -> (i32, i32) {
    %c0_i32 = arith.constant 0 : i32
    %c0_i32_0 = arith.constant 0 : i32
    %c0_i32_1 = arith.constant 0 : i32
    return %c0_i32, %c0_i32_0 : i32, i32
  }
  func.func @transform_3(%arg0: i32) -> (i32, i32) {
    %c0_i32 = arith.constant 0 : i32
    %c0_i32_0 = arith.constant 0 : i32
    %c0_i32_1 = arith.constant 0 : i32
    return %c0_i32, %c0_i32_0 : i32, i32
  }
  func.func @transform_4(%arg0: i32) -> (i32, i32) {
    %c0_i32 = arith.constant 0 : i32
    %c0_i32_0 = arith.constant 0 : i32
    %c0_i32_1 = arith.constant 0 : i32
    return %c0_i32, %c0_i32_0 : i32, i32
  }
}

module attributes {stable_mosaic.version = 11 : i64} {
  func.func @_review_attention_kernel(%arg0: i32, %arg1: memref<2x8x32xf32, #tpu.memory_space<vmem>>, %arg2: memref<2x1x32xf32, #tpu.memory_space<vmem>>, %arg3: memref<2x1x32xf32, #tpu.memory_space<vmem>>) attributes {dimension_semantics = [#tpu.dimension_semantics<parallel>], iteration_bounds = array<i64: 2>, scalar_prefetch = 0 : i64, scratch_operands = 0 : i64, tpu.core_type = #tpu.core_type<tc>, window_params = [{transform_indices = @transform_0, window_bounds = array<i64: 2, 8, 32>}, {transform_indices = @transform_1, window_bounds = array<i64: 2, 1, 32>}, {transform_indices = @transform_2, window_bounds = array<i64: 2, 1, 32>}]} {
    %c0 = arith.constant 0 : index
    %c0_0 = arith.constant 0 : index
    %c0_1 = arith.constant 0 : index
    %0 = vector.load %arg1[%c0, %c0_0, %c0_1] : memref<2x8x32xf32, #tpu.memory_space<vmem>>, vector<2x8x32xf32>
    %c0_2 = arith.constant 0 : index
    %c0_3 = arith.constant 0 : index
    %c0_4 = arith.constant 0 : index
    %1 = vector.load %arg2[%c0_2, %c0_3, %c0_4] : memref<2x1x32xf32, #tpu.memory_space<vmem>>, vector<2x1x32xf32>
    %2 = vector.broadcast %1 : vector<2x1x32xf32> to vector<2x8x32xf32>
    %3 = arith.mulf %0, %2 : vector<2x8x32xf32>
    %cst = arith.constant dense<0.000000e+00> : vector<2x8xf32>
    %4 = vector.multi_reduction <add>, %3, %cst [2] : vector<2x8x32xf32> to vector<2x8xf32>
    %5 = vector.shape_cast %4 : vector<2x8xf32> to vector<2x8x1xf32>
    %cst_5 = arith.constant dense<0xFF800000> : vector<2x1xf32>
    %6 = vector.multi_reduction <maximumf>, %5, %cst_5 [1] : vector<2x8x1xf32> to vector<2x1xf32>
    %7 = vector.shape_cast %6 : vector<2x1xf32> to vector<2x1x1xf32>
    %8 = vector.broadcast %7 : vector<2x1x1xf32> to vector<2x8x1xf32>
    %9 = arith.subf %5, %8 : vector<2x8x1xf32>
    %10 = math.exp %9 : vector<2x8x1xf32>
    %cst_6 = arith.constant dense<0.000000e+00> : vector<2x1xf32>
    %11 = vector.multi_reduction <add>, %10, %cst_6 [1] : vector<2x8x1xf32> to vector<2x1xf32>
    %12 = vector.shape_cast %11 : vector<2x1xf32> to vector<2x1x1xf32>
    %13 = tpu.reciprocal %12 {approx = true} : vector<2x1x1xf32> -> vector<2x1x1xf32>
    %14 = vector.broadcast %13 : vector<2x1x1xf32> to vector<2x8x1xf32>
    %15 = arith.mulf %10, %14 : vector<2x8x1xf32>
    %16 = vector.broadcast %15 : vector<2x8x1xf32> to vector<2x8x32xf32>
    %17 = arith.mulf %16, %0 : vector<2x8x32xf32>
    %cst_7 = arith.constant dense<0.000000e+00> : vector<2x32xf32>
    %18 = vector.multi_reduction <add>, %17, %cst_7 [1] : vector<2x8x32xf32> to vector<2x32xf32>
    %19 = vector.shape_cast %18 : vector<2x32xf32> to vector<2x1x32xf32>
    %c0_8 = arith.constant 0 : index
    %c0_9 = arith.constant 0 : index
    %c0_10 = arith.constant 0 : index
    %20 = vector.load %arg3[%c0_8, %c0_9, %c0_10] : memref<2x1x32xf32, #tpu.memory_space<vmem>>, vector<2x1x32xf32>
    tpu.vector_store %arg3[%c0_8, %c0_9, %c0_10], %19 {strides = array<i32>} : memref<2x1x32xf32, #tpu.memory_space<vmem>>, vector<2x1x32xf32>,
    return
  }
  func.func @transform_0(%arg0: i32) -> (i32, i32, i32) {
    %c0_i32 = arith.constant 0 : i32
    %c0_i32_0 = arith.constant 0 : i32
    %c0_i32_1 = arith.constant 0 : i32
    return %arg0, %c0_i32, %c0_i32_0 : i32, i32, i32
  }
  func.func @transform_1(%arg0: i32) -> (i32, i32, i32) {
    %c0_i32 = arith.constant 0 : i32
    %c0_i32_0 = arith.constant 0 : i32
    %c0_i32_1 = arith.constant 0 : i32
    return %arg0, %c0_i32, %c0_i32_0 : i32, i32, i32
  }
  func.func @transform_2(%arg0: i32) -> (i32, i32, i32) {
    %c0_i32 = arith.constant 0 : i32
    %c0_i32_0 = arith.constant 0 : i32
    %c0_i32_1 = arith.constant 0 : i32
    return %arg0, %c0_i32, %c0_i32_0 : i32, i32, i32
  }
}

</mosaic_0001>

<llo_original>
// kernel: attention_layer.3
$region0: #{attention_layer.3}
  #allocation0 [shape = 'u32[]', space=smem, size = 0x4, offset = 0x4, fixed_abs, tag = 'smem constant byte address 0x4 - core index']
  #allocation1 [shape = 'u32[144,128]{1,0:T(1,128)}', space=vmem, size = 0x12000, scoped, tag = 'internal scratch']
  %s0 = inlined_call_operand.vmem [shape: f32[4,8,32], index: 0, kind: input, shape index: {}]
  %s1 = inlined_call_operand.vmem [shape: f32[4,1,32], index: 1, kind: input, shape index: {}]
  %s2 = inlined_call_operand.hbm [shape: f32[4,1,32], index: 2, kind: output, shape index: {}]
  %s3 = sld [smem:[#allocation0]]
  $region41: #{attention_layer.3} parent=0
    _
  %s5 = ssub.s32 1, %s3
  %s6 = scalar_select 0, %s5, %s3
  $region1: #{attention_layer.3} parent=0
    #allocation2 [shape = 'u8[2048]{0}', space=vmem, size = 0x800, scoped, tag = 'output window, operand 0']
    #allocation3 [shape = 's32[2]{0}', space=sflag, size = 0x8, scoped, tag = 'scoped memory for attention_layer.3']
    %7 = vsyncpa [#allocation3], 0
    %s8 = scalar_lea.sflag [#allocation3], 1
    %9 = vsyncpa %s8, 0
    loop: start=0, step=1, limit=4
    $region2: #{attention_layer.3} parent=1 // loop_pre_header
      _
    $region3: #{attention_layer.3} parent=1 // loop_header
      %s11 = sphi 0, %s15
      %p12 = scmp.ge.s32.totalorder %s11, 4
      %s21 = sphi 0, %s23
      %s24 = sphi 0, %s21
      %s25 = sphi 0, %s24
      %s41 = sphi 0, %s25
      %s47 = sphi 0, %s49
      %s50 = sphi 0, %s47
      %s51 = sphi 0, %s50
      %s67 = sphi 0, %s51
      %s73 = sphi 0, %s75
      %s76 = sphi 0, %s73
      %s77 = sphi 0, %s76
      %s93 = sphi 0, %s77
    $region4: #{attention_layer.3} parent=1 // loop_header_branch
      %14 = sbr.rel (%p12) target = $region8
    $region5: #{attention_layer.3} parent=1 // loop_body
      %s16 = ssub.s32 %s11, 1
      %s17 = ssub.s32 %s11, 2
      %s18 = sadd.s32 %s11, 1
      %s19 = ssub.s32 %s11, %s18
      %p20 = scmp.eq.s32.totalorder %s19, 0
      %s22 = sadd.s32 %s21, 1
      %s23 = scalar_select %p20, %s21, %s22
      %p26 = pneg %p20
      %p27 = scmp.eq.s32.totalorder %s11, 1
      %p28 = por %p26, %p27
      %p29 = scmp.ne.s32.totalorder %s21, %s24
      %p30 = scmp.eq.s32.totalorder %s11, 0
      %p31 = por %p29, %p30
      %p32 = scmp.ne.s32.totalorder %s21, %s24
      %p33 = scmp.eq.s32.totalorder %s16, 1
      %p34 = por %p32, %p33
      %p35 = scmp.ne.s32.totalorder %s24, %s25
      %p36 = scmp.eq.s32.totalorder %s16, 0
      %p37 = por %p35, %p36
      %p38 = scmp.ne.s32.totalorder %s24, %s25
      %p39 = scmp.eq.s32.totalorder %s17, 1
      %p40 = por %p38, %p39
      %p42 = scmp.ne.s32.totalorder %s25, %s41
      %p43 = scmp.eq.s32.totalorder %s17, 0
      %p44 = por %p42, %p43
      %s45 = ssub.s32 %s11, %s18
      %p46 = scmp.eq.s32.totalorder %s45, 0
      %s48 = sadd.s32 %s47, 1
      %s49 = scalar_select %p46, %s47, %s48
      %p52 = pneg %p46
      %p53 = scmp.eq.s32.totalorder %s11, 1
      %p54 = por %p52, %p53
      %p55 = scmp.ne.s32.totalorder %s47, %s50
      %p56 = scmp.eq.s32.totalorder %s11, 0
      %p57 = por %p55, %p56
      %p58 = scmp.ne.s32.totalorder %s47, %s50
      %p59 = scmp.eq.s32.totalorder %s16, 1
      %p60 = por %p58, %p59
      %p61 = scmp.ne.s32.totalorder %s50, %s51
      %p62 = scmp.eq.s32.totalorder %s16, 0
      %p63 = por %p61, %p62
      %p64 = scmp.ne.s32.totalorder %s50, %s51
      %p65 = scmp.eq.s32.totalorder %s17, 1
      %p66 = por %p64, %p65
      %p68 = scmp.ne.s32.totalorder %s51, %s67
      %p69 = scmp.eq.s32.totalorder %s17, 0
      %p70 = por %p68, %p69
      %s71 = ssub.s32 %s11, %s18
      %p72 = scmp.eq.s32.totalorder %s71, 0
      %s74 = sadd.s32 %s73, 1
      %s75 = scalar_select %p72, %s73, %s74
      %p78 = pneg %p72
      %p79 = scmp.eq.s32.totalorder %s11, 1
      %p80 = por %p78, %p79
      %p81 = scmp.ne.s32.totalorder %s73, %s76
      %p82 = scmp.eq.s32.totalorder %s11, 0
      %p83 = por %p81, %p82
      %p84 = scmp.ne.s32.totalorder %s73, %s76
      %p85 = scmp.eq.s32.totalorder %s16, 1
      %p86 = por %p84, %p85
      %p87 = scmp.ne.s32.totalorder %s76, %s77
      %p88 = scmp.eq.s32.totalorder %s16, 0
      %p89 = por %p87, %p88
      %p90 = scmp.ne.s32.totalorder %s76, %s77
      %p91 = scmp.eq.s32.totalorder %s17, 1
      %p92 = por %p90, %p91
      %p94 = scmp.ne.s32.totalorder %s77, %s93
      %p95 = scmp.eq.s32.totalorder %s17, 0
      %p96 = por %p94, %p95
      %p97 = scmp.le.s32.totalorder 1, %s11
      %p98 = scmp.lt.s32.totalorder %s11, 3
      %p99 = pnand %p97, %p98
      %p100 = pneg %p99
      // Predicated region
      $region9: #{attention_layer.3} parent=5 // pred_check
        _
      $region10: #{attention_layer.3} parent=5 // pred_check_branch
        %102 = sbr.rel (%p99) target = $region12
      $region11: #{attention_layer.3} parent=5 // pred_region
        %s103 = ssub.s32 %s11, 1
      $region12: #{attention_layer.3} parent=5 // pred_fallthru
        _
      %p104 = scmp.lt.s32.totalorder %s11, 2
      // Predicated region
      $region13: #{attention_layer.3} parent=5 // pred_check
        %p105 = pneg %p104
      $region14: #{attention_layer.3} parent=5 // pred_check_branch
        %107 = sbr.rel (%p105) target = $region16
      $region15: #{attention_layer.3} parent=5 // pred_region
        // Predicated region
        $region17: #{attention_layer.3} parent=15 // pred_check
          %p108 = pneg %p31
        $region18: #{attention_layer.3} parent=15 // pred_check_branch
          %110 = sbr.rel (%p108) target = $region20
        $region19: #{attention_layer.3} parent=15 // pred_region
          %s111 = smul.u32 2, %s11
          %p112 = scmp.lt.s32.totalorder %s111, 3
          %s113 = scalar_select %p112, %s111, 3
          %s114 = smul.addr %s113, 8
          %s115 = scalar_lea.vmem %s0, %s114
          %s116 = smul.u32 2, %s11
        $region20: #{attention_layer.3} parent=15 // pred_fallthru
          _
        // Predicated region
        $region21: #{attention_layer.3} parent=15 // pred_check
          %p117 = pneg %p57
        $region22: #{attention_layer.3} parent=15 // pred_check_branch
          %119 = sbr.rel (%p117) target = $region24
        $region23: #{attention_layer.3} parent=15 // pred_region
          %s120 = smul.u32 2, %s11
          %p121 = scmp.lt.s32.totalorder %s120, 3
          %s122 = scalar_select %p121, %s120, 3
          %s123 = scalar_lea.vmem %s1, %s122
          %s124 = smul.u32 2, %s11
        $region24: #{attention_layer.3} parent=15 // pred_fallthru
          _
      $region16: #{attention_layer.3} parent=5 // pred_fallthru
        _
      %p125 = scmp.le.s32.totalorder 1, %s11
      %p126 = scmp.lt.s32.totalorder %s11, 3
      %p127 = pnand %p125, %p126
      %p128 = pneg %p127
      // Predicated region
      $region25: #{attention_layer.3} parent=5 // pred_check
        _
      $region26: #{attention_layer.3} parent=5 // pred_check_branch
        %130 = sbr.rel (%p127) target = $region28
      $region27: #{attention_layer.3} parent=5 // pred_region
        %s131 = ssub.s32 %s11, 1
        %s132 = smul.u32 2, %s16
        %p133 = scmp.lt.s32.totalorder %s132, 3
        %s134 = scalar_select %p133, %s132, 3
        %s135 = smul.addr %s134, 8
        %s136 = scalar_lea.vmem %s0, %s135
        %p137 = pneg %p37
        %p138 = pneg %p34
        %s139 = smul.u32 2, %s16
        %p140 = scmp.lt.s32.totalorder %s139, 3
        %s141 = scalar_select %p140, %s139, 3
        %s142 = scalar_lea.vmem %s1, %s141
        %p143 = pneg %p63
        %p144 = pneg %p60
        %p145 = pneg %p89
        %p146 = pneg %p86
        %s147 = sand.u32 %s76, 1
        %s148 = scalar_lea.sflag [#allocation3], %s147
        %s149 = sand.u32 %s76, 1
        %s150 = smul.addr %s149, 2
        %s151 = scalar_lea.vmem [#allocation2], %s150
        %s152 = smul.u32 2, %s16
        %p153 = scmp.lt.s32.totalorder %s152, 3
        %s154 = scalar_select %p153, %s152, 3
        %s155 = smul.addr %s154, 8
        %s156 = scalar_lea.vmem %s0, %s155
        %s157 = smul.u32 2, %s16
        %s158 = smul.u32 2, %s16
        %p159 = scmp.lt.s32.totalorder %s158, 3
        %s160 = scalar_select %p159, %s158, 3
        %s161 = scalar_lea.vmem %s1, %s160
        %s162 = smul.u32 2, %s16
        %s163 = smul.u32 2, %s16
        %v164 = vld [vmem:[%s156] sm:$0xff]
        %v165 = vld [vmem:[%s156 + $0x8] sm:$0xff]
        %v166 = vld [vmem:[%s161] sm:$0x1]
        %v167 = vld [vmem:[%s161 + $0x1] sm:$0x1]
        %v170 = vlaneseq
        %v171 = vshrl.u32 %v170, 7
        %v172 = vsub.s32 0, %v171
        %v173 = vrot.slane %v166, %v172
        %v174 = vlaneseq
        %v175 = vshrl.u32 %v174, 7
        %v176 = vsub.s32 0, %v175
        %v177 = vrot.slane %v167, %v176
        %v180 = vmul.f32 %v164, %v173
        %v181 = vmul.f32 %v165, %v177
        %vm182 = vcmask 261120
        %v183 = vsel %vm182, %v180, 0.0
        %184 = vadd.xlane.f32.xlu0 %v183
        %v185 = vpop.xlane.xlu0 %184
        %v186 = vsel %vm182, %v181, 0.0
        %187 = vadd.xlane.f32.xlu0 %v186
        %v188 = vpop.xlane.xlu0 %187
        %v189 = vrot.slane %v185, 4
        %v190 = vmax.f32 %v185, %v189
        %v191 = vrot.slane %v190, 2
        %v192 = vmax.f32 %v190, %v191
        %v193 = vrot.slane %v192, 1
        %v194 = vmax.f32 %v192, %v193
        %v195 = vrot.slane %v188, 4
        %v196 = vmax.f32 %v188, %v195
        %v197 = vrot.slane %v196, 2
        %v198 = vmax.f32 %v196, %v197
        %v199 = vrot.slane %v198, 1
        %v200 = vmax.f32 %v198, %v199
        %v201 = vsub.f32 %v185, %v194
        %v202 = vsub.f32 %v188, %v200
        %v203 = vmul.f32 %v201, 1.442695
        %v204 = vpow.pop %v203
        %v205 = vmul.f32 %v202, 1.442695
        %v206 = vpow.pop %v205
        %v207 = vrot.slane %v204, 4
        %v208 = vadd.f32 %v204, %v207
        %v209 = vrot.slane %v208, 2
        %v210 = vadd.f32 %v208, %v209
        %v211 = vrot.slane %v210, 1
        %v212 = vadd.f32 %v210, %v211
        %v213 = vrot.slane %v206, 4
        %v214 = vadd.f32 %v206, %v213
        %v215 = vrot.slane %v214, 2
        %v216 = vadd.f32 %v214, %v215
        %v217 = vrot.slane %v216, 1
        %v218 = vadd.f32 %v216, %v217
        %v219 = vrcp.pop %v212
        %v220 = vrcp.pop %v218
        %v221 = vmul.f32 %v204, %v219
        %v222 = vmul.f32 %v206, %v220
        %v223 = vmul.f32 %v221, %v164
        %v224 = vmul.f32 %v222, %v165
        %v225 = vsel %vm182, %v223, 0.0
        %v226 = vrot.slane %v225, 4
        %v227 = vadd.f32 %v225, %v226
        %v228 = vrot.slane %v227, 2
        %v229 = vadd.f32 %v227, %v228
        %v230 = vrot.slane %v229, 1
        %v231 = vadd.f32 %v229, %v230
        %v232 = vsel %vm182, %v224, 0.0
        %v233 = vrot.slane %v232, 4
        %v234 = vadd.f32 %v232, %v233
        %v235 = vrot.slane %v234, 2
        %v236 = vadd.f32 %v234, %v235
        %v237 = vrot.slane %v236, 1
        %v238 = vadd.f32 %v236, %v237
        %vm239 = vcmask 253952
        %240 = vst.msk [vmem:[%s151] sm:$0x1] %vm239, %v231
        %241 = vst.msk [vmem:[%s151 + $0x1] sm:$0x1] %vm239, %v238
        %s242 = sand.u32 %s76, 1
        %s243 = scalar_lea.sflag [#allocation3], %s242
        %s244 = sand.u32 %s76, 1
        %s245 = smul.addr %s244, 2
        %s246 = scalar_lea.vmem [#allocation2], %s245
        // Predicated region
        $region29: #{attention_layer.3} parent=27 // pred_check
          %p247 = pneg %p86
        $region30: #{attention_layer.3} parent=27 // pred_check_branch
          %249 = sbr.rel (%p247) target = $region32
        $region31: #{attention_layer.3} parent=27 // pred_region
          %s250 = smul.u32 2, %s16
          %s252 = ssub.s32 32, 32
          %253 = vsyncadd %s243, %s252
          %s254 = smul.addr %s250, 16
          %s255 = scalar_lea.hbm %s2, %s254
          %s256 = sshll.u32 %s246, 4
          %s257 = int_to_ptr.vmem [resolvable:$true] %s256
          %262 = dma.vmem_to_hbm [thread:$0]  %s257, 32, %s255, %s243, 16, 16, 1
        $region32: #{attention_layer.3} parent=27 // pred_fallthru
          _
      $region28: #{attention_layer.3} parent=5 // pred_fallthru
        _
      %p263 = scmp.le.s32.totalorder 2, %s11
      // Predicated region
      $region33: #{attention_layer.3} parent=5 // pred_check
        %p264 = pneg %p263
      $region34: #{attention_layer.3} parent=5 // pred_check_branch
        %266 = sbr.rel (%p264) target = $region36
      $region35: #{attention_layer.3} parent=5 // pred_region
        %s267 = ssub.s32 %s11, 2
        // Predicated region
        $region37: #{attention_layer.3} parent=35 // pred_check
          %p268 = pneg %p92
        $region38: #{attention_layer.3} parent=35 // pred_check_branch
          %270 = sbr.rel (%p268) target = $region40
        $region39: #{attention_layer.3} parent=35 // pred_region
          %s271 = sand.u32 %s77, 1
          %s272 = scalar_lea.sflag [#allocation3], %s271
          %s273 = sand.u32 %s77, 1
          %s274 = smul.addr %s273, 2
          %s275 = scalar_lea.vmem [#allocation2], %s274
          %276 = dma.done %s272, 32
        $region40: #{attention_layer.3} parent=35 // pred_fallthru
          _
      $region36: #{attention_layer.3} parent=5 // pred_fallthru
        _
    $region6: #{attention_layer.3} parent=1 // loop_footer
      %s15 = sadd.s32 1, %s11
    $region7: #{attention_layer.3} parent=1 // loop_footer_branch
      %10 = sbr.rel target = $region3
    $region8: #{attention_layer.3} parent=1 // loop_exit
      _
    %277 = vsyncpa [#allocation3], 1
    %s278 = scalar_lea.sflag [#allocation3], 1
    %279 = vsyncpa %s278, 1

// kernel: attention_layer.2
$region0: #{attention_layer.2}
  #allocation0 [shape = 'u32[]', space=smem, size = 0x4, offset = 0x4, fixed_abs, tag = 'smem constant byte address 0x4 - core index']
  #allocation1 [shape = 'u32[144,128]{1,0:T(1,128)}', space=vmem, size = 0x12000, scoped, tag = 'internal scratch']
  %s0 = inlined_call_operand.vmem [shape: f32[4,32], index: 0, kind: input, shape index: {}]
  %s1 = inlined_call_operand.vmem [shape: f32[32,512], index: 1, kind: input, shape index: {}]
  %s2 = inlined_call_operand.vmem [shape: f32[1,512], index: 2, kind: input, shape index: {}]
  %s3 = inlined_call_operand.vmem [shape: f32[512,32], index: 3, kind: input, shape index: {}]
  %s4 = inlined_call_operand.vmem [shape: f32[4,32], index: 4, kind: output, shape index: {}]
  %s5 = sld [smem:[#allocation0]]
  $region26: #{attention_layer.2} parent=0
    _
  %s7 = ssub.s32 1, %s5
  %s8 = scalar_select 0, %s7, %s5
  // Predicated region
  $region2: #{attention_layer.2} parent=0 // pred_check
    _
  $region3: #{attention_layer.2} parent=0 // pred_check_branch
    %10 = sbr.rel (0) target = $region5
  $region4: #{attention_layer.2} parent=0 // pred_region
    _
  $region5: #{attention_layer.2} parent=0 // pred_fallthru
    _
  // Predicated region
  $region6: #{attention_layer.2} parent=0 // pred_check
    _
  $region7: #{attention_layer.2} parent=0 // pred_check_branch
    %12 = sbr.rel (0) target = $region9
  $region8: #{attention_layer.2} parent=0 // pred_region
    _
  $region9: #{attention_layer.2} parent=0 // pred_fallthru
    _
  // Predicated region
  $region10: #{attention_layer.2} parent=0 // pred_check
    _
  $region11: #{attention_layer.2} parent=0 // pred_check_branch
    %14 = sbr.rel (0) target = $region13
  $region12: #{attention_layer.2} parent=0 // pred_region
    _
  $region13: #{attention_layer.2} parent=0 // pred_fallthru
    _
  // Predicated region
  $region14: #{attention_layer.2} parent=0 // pred_check
    _
  $region15: #{attention_layer.2} parent=0 // pred_check_branch
    %16 = sbr.rel (0) target = $region17
  $region16: #{attention_layer.2} parent=0 // pred_region
    _
  $region17: #{attention_layer.2} parent=0 // pred_fallthru
    _
  %v17 = vld [vmem:[%s0] sm:$0xf]
  %v18 = vld [vmem:[%s1] sm:$0xff]
  %v19 = vld [vmem:[%s1 + $0x8] sm:$0xff]
  %v20 = vld [vmem:[%s1 + $0x10] sm:$0xff]
  %v21 = vld [vmem:[%s1 + $0x18] sm:$0xff]
  %v22 = vld [vmem:[%s1 + $0x20] sm:$0xff]
  %v23 = vld [vmem:[%s1 + $0x28] sm:$0xff]
  %v24 = vld [vmem:[%s1 + $0x30] sm:$0xff]
  %v25 = vld [vmem:[%s1 + $0x38] sm:$0xff]
  %v26 = vld [vmem:[%s1 + $0x40] sm:$0xff]
  %v27 = vld [vmem:[%s1 + $0x48] sm:$0xff]
  %v28 = vld [vmem:[%s1 + $0x50] sm:$0xff]
  %v29 = vld [vmem:[%s1 + $0x58] sm:$0xff]
  %v30 = vld [vmem:[%s1 + $0x60] sm:$0xff]
  %v31 = vld [vmem:[%s1 + $0x68] sm:$0xff]
  %v32 = vld [vmem:[%s1 + $0x70] sm:$0xff]
  %v33 = vld [vmem:[%s1 + $0x78] sm:$0xff]
  %v34 = vld [vmem:[%s2] sm:$0xf]
  %v35 = vld [vmem:[%s3] sm:$0xff]
  %v36 = vld [vmem:[%s3 + $0x8] sm:$0xff]
  %v37 = vld [vmem:[%s3 + $0x10] sm:$0xff]
  %v38 = vld [vmem:[%s3 + $0x18] sm:$0xff]
  %v39 = vld [vmem:[%s3 + $0x20] sm:$0xff]
  %v40 = vld [vmem:[%s3 + $0x28] sm:$0xff]
  %v41 = vld [vmem:[%s3 + $0x30] sm:$0xff]
  %v42 = vld [vmem:[%s3 + $0x38] sm:$0xff]
  %v43 = vld [vmem:[%s3 + $0x40] sm:$0xff]
  %v44 = vld [vmem:[%s3 + $0x48] sm:$0xff]
  %v45 = vld [vmem:[%s3 + $0x50] sm:$0xff]
  %v46 = vld [vmem:[%s3 + $0x58] sm:$0xff]
  %v47 = vld [vmem:[%s3 + $0x60] sm:$0xff]
  %v48 = vld [vmem:[%s3 + $0x68] sm:$0xff]
  %v49 = vld [vmem:[%s3 + $0x70] sm:$0xff]
  %v50 = vld [vmem:[%s3 + $0x78] sm:$0xff]
  %v51 = vld [vmem:[%s3 + $0x80] sm:$0xff]
  %v52 = vld [vmem:[%s3 + $0x88] sm:$0xff]
  %v53 = vld [vmem:[%s3 + $0x90] sm:$0xff]
  %v54 = vld [vmem:[%s3 + $0x98] sm:$0xff]
  %v55 = vld [vmem:[%s3 + $0xa0] sm:$0xff]
  %v56 = vld [vmem:[%s3 + $0xa8] sm:$0xff]
  %v57 = vld [vmem:[%s3 + $0xb0] sm:$0xff]
  %v58 = vld [vmem:[%s3 + $0xb8] sm:$0xff]
  %v59 = vld [vmem:[%s3 + $0xc0] sm:$0xff]
  %v60 = vld [vmem:[%s3 + $0xc8] sm:$0xff]
  %v61 = vld [vmem:[%s3 + $0xd0] sm:$0xff]
  %v62 = vld [vmem:[%s3 + $0xd8] sm:$0xff]
  %v63 = vld [vmem:[%s3 + $0xe0] sm:$0xff]
  %v64 = vld [vmem:[%s3 + $0xe8] sm:$0xff]
  %v65 = vld [vmem:[%s3 + $0xf0] sm:$0xff]
  %v66 = vld [vmem:[%s3 + $0xf8] sm:$0xff]
  %v67 = vld [vmem:[%s3 + $0x100] sm:$0xff]
  %v68 = vld [vmem:[%s3 + $0x108] sm:$0xff]
  %v69 = vld [vmem:[%s3 + $0x110] sm:$0xff]
  %v70 = vld [vmem:[%s3 + $0x118] sm:$0xff]
  %v71 = vld [vmem:[%s3 + $0x120] sm:$0xff]
  %v72 = vld [vmem:[%s3 + $0x128] sm:$0xff]
  %v73 = vld [vmem:[%s3 + $0x130] sm:$0xff]
  %v74 = vld [vmem:[%s3 + $0x138] sm:$0xff]
  %v75 = vld [vmem:[%s3 + $0x140] sm:$0xff]
  %v76 = vld [vmem:[%s3 + $0x148] sm:$0xff]
  %v77 = vld [vmem:[%s3 + $0x150] sm:$0xff]
  %v78 = vld [vmem:[%s3 + $0x158] sm:$0xff]
  %v79 = vld [vmem:[%s3 + $0x160] sm:$0xff]
  %v80 = vld [vmem:[%s3 + $0x168] sm:$0xff]
  %v81 = vld [vmem:[%s3 + $0x170] sm:$0xff]
  %v82 = vld [vmem:[%s3 + $0x178] sm:$0xff]
  %v83 = vld [vmem:[%s3 + $0x180] sm:$0xff]
  %v84 = vld [vmem:[%s3 + $0x188] sm:$0xff]
  %v85 = vld [vmem:[%s3 + $0x190] sm:$0xff]
  %v86 = vld [vmem:[%s3 + $0x198] sm:$0xff]
  %v87 = vld [vmem:[%s3 + $0x1a0] sm:$0xff]
  %v88 = vld [vmem:[%s3 + $0x1a8] sm:$0xff]
  %v89 = vld [vmem:[%s3 + $0x1b0] sm:$0xff]
  %v90 = vld [vmem:[%s3 + $0x1b8] sm:$0xff]
  %v91 = vld [vmem:[%s3 + $0x1c0] sm:$0xff]
  %v92 = vld [vmem:[%s3 + $0x1c8] sm:$0xff]
  %v93 = vld [vmem:[%s3 + $0x1d0] sm:$0xff]
  %v94 = vld [vmem:[%s3 + $0x1d8] sm:$0xff]
  %v95 = vld [vmem:[%s3 + $0x1e0] sm:$0xff]
  %v96 = vld [vmem:[%s3 + $0x1e8] sm:$0xff]
  %v97 = vld [vmem:[%s3 + $0x1f0] sm:$0xff]
  %v98 = vld [vmem:[%s3 + $0x1f8] sm:$0xff]
  %v100 = vlaneseq
  %v101 = vshrl.u32 %v100, 7
  %v102 = vsub.s32 0, %v101
  %v103 = vrot.slane %v34, %v102
  %v104 = vlaneseq
  %v105 = vshrl.u32 %v104, 7
  %v106 = vsub.s32 1, %v105
  %v107 = vrot.slane %v34, %v106
  %v108 = vlaneseq
  %v109 = vshrl.u32 %v108, 7
  %v110 = vsub.s32 2, %v109
  %v111 = vrot.slane %v34, %v110
  %v112 = vlaneseq
  %v113 = vshrl.u32 %v112, 7
  %v114 = vsub.s32 3, %v113
  %v115 = vrot.slane %v34, %v114
  %vm120 = vcmask 261120
  %v122 = vsel %vm120, %v17, 0
  %124 = vmatprep.subr.mxu0 %v19
  %125 = vmatpush1.msra.mxu0 %v18
  %126 = vmatprep.subr.mxu0 %v23
  %127 = vmatpush1.msra.mxu0 %v22
  %128 = vmatprep.subr.mxu0 %v27
  %129 = vmatpush1.msra.mxu0 %v26
  %130 = vmatprep.subr.mxu0 %v31
  %131 = vmatpush1.msra.mxu0 %v30
  %132 = vmatprep.subr.mxu0 0.0
  %133 = vmatpush1.msra.mxu0 0.0
  %134 = vmatprep.subr.mxu0 0.0
  %135 = vmatpush1.msra.mxu0 0.0
  %136 = vmatprep.subr.mxu0 0.0
  %137 = vmatpush1.msra.mxu0 0.0
  %138 = vmatprep.subr.mxu0 0.0
  %139 = vmatpush1.msra.mxu0 0.0
  %140 = vmatprep.subr.mxu0 0.0
  %141 = vmatpush1.msra.mxu0 0.0
  %142 = vmatprep.subr.mxu0 0.0
  %143 = vmatpush1.msra.mxu0 0.0
  %144 = vmatprep.subr.mxu0 0.0
  %145 = vmatpush1.msra.mxu0 0.0
  %146 = vmatprep.subr.mxu0 0.0
  %147 = vmatpush1.msra.mxu0 0.0
  %148 = vmatprep.subr.mxu0 0.0
  %149 = vmatpush1.msra.mxu0 0.0
  %150 = vmatprep.subr.mxu0 0.0
  %151 = vmatpush1.msra.mxu0 0.0
  %152 = vmatprep.subr.mxu0 0.0
  %153 = vmatpush1.msra.mxu0 0.0
  %154 = vmatprep.subr.mxu0 0.0
  %155 = vmatpush1.msra.mxu0 0.0
  %156 = vmatprep.subr.mxu0 0.0
  %157 = vmatpush1.msra.mxu0 0.0
  %158 = vmatprep.subr.mxu0 0.0
  %159 = vmatpush1.msra.mxu0 0.0
  %160 = vmatprep.subr.mxu0 0.0
  %161 = vmatpush1.msra.mxu0 0.0
  %162 = vmatprep.subr.mxu0 0.0
  %163 = vmatpush1.msra.mxu0 0.0
  %164 = vmatprep.subr.mxu0 0.0
  %165 = vmatpush1.msra.mxu0 0.0
  %166 = vmatprep.subr.mxu0 0.0
  %167 = vmatpush1.msra.mxu0 0.0
  %168 = vmatprep.subr.mxu0 0.0
  %169 = vmatpush1.msra.mxu0 0.0
  %170 = vmatprep.subr.mxu0 0.0
  %171 = vmatpush1.msra.mxu0 0.0
  %172 = vmatprep.subr.mxu0 0.0
  %173 = vmatpush1.msra.mxu0 0.0
  %174 = vmatprep.subr.mxu0 0.0
  %175 = vmatpush1.msra.mxu0 0.0
  %176 = vmatprep.subr.mxu0 0.0
  %177 = vmatpush1.msra.mxu0 0.0
  %178 = vmatprep.subr.mxu0 0.0
  %179 = vmatpush1.msra.mxu0 0.0
  %180 = vmatprep.subr.mxu0 0.0
  %181 = vmatpush1.msra.mxu0 0.0
  %182 = vmatprep.subr.mxu0 0.0
  %183 = vmatpush1.msra.mxu0 0.0
  %184 = vmatprep.subr.mxu0 0.0
  %185 = vmatpush1.msra.mxu0 0.0
  %186 = vmatprep.subr.mxu0 0.0
  %187 = vmatpush1.msra.mxu0 0.0
  %188 = vmatprep.mubr.f32.mxu0 0.0
  %189 = vmatmul.mubr.f32.gmra.mrb[0].mxu0 %v122
  %v190 = vpop.f32.mrb[0].mxu0
  %v191 = vadd.f32 %v103, %v190
  %v192 = vpop.f32.mrb[0].mxu0
  %v193 = vadd.f32 %v107, %v192
  %194 = vdwg.mxu0
  %195 = vmatprep.subr.mxu0 %v21
  %196 = vmatpush1.msra.mxu0 %v20
  %197 = vmatprep.subr.mxu0 %v25
  %198 = vmatpush1.msra.mxu0 %v24
  %199 = vmatprep.subr.mxu0 %v29
  %200 = vmatpush1.msra.mxu0 %v28
  %201 = vmatprep.subr.mxu0 %v33
  %202 = vmatpush1.msra.mxu0 %v32
  %203 = vmatprep.subr.mxu0 0.0
  %204 = vmatpush1.msra.mxu0 0.0
  %205 = vmatprep.subr.mxu0 0.0
  %206 = vmatpush1.msra.mxu0 0.0
  %207 = vmatprep.subr.mxu0 0.0
  %208 = vmatpush1.msra.mxu0 0.0
  %209 = vmatprep.subr.mxu0 0.0
  %210 = vmatpush1.msra.mxu0 0.0
  %211 = vmatprep.subr.mxu0 0.0
  %212 = vmatpush1.msra.mxu0 0.0
  %213 = vmatprep.subr.mxu0 0.0
  %214 = vmatpush1.msra.mxu0 0.0
  %215 = vmatprep.subr.mxu0 0.0
  %216 = vmatpush1.msra.mxu0 0.0
  %217 = vmatprep.subr.mxu0 0.0
  %218 = vmatpush1.msra.mxu0 0.0
  %219 = vmatprep.subr.mxu0 0.0
  %220 = vmatpush1.msra.mxu0 0.0
  %221 = vmatprep.subr.mxu0 0.0
  %222 = vmatpush1.msra.mxu0 0.0
  %223 = vmatprep.subr.mxu0 0.0
  %224 = vmatpush1.msra.mxu0 0.0
  %225 = vmatprep.subr.mxu0 0.0
  %226 = vmatpush1.msra.mxu0 0.0
  %227 = vmatprep.subr.mxu0 0.0
  %228 = vmatpush1.msra.mxu0 0.0
  %229 = vmatprep.subr.mxu0 0.0
  %230 = vmatpush1.msra.mxu0 0.0
  %231 = vmatprep.subr.mxu0 0.0
  %232 = vmatpush1.msra.mxu0 0.0
  %233 = vmatprep.subr.mxu0 0.0
  %234 = vmatpush1.msra.mxu0 0.0
  %235 = vmatprep.subr.mxu0 0.0
  %236 = vmatpush1.msra.mxu0 0.0
  %237 = vmatprep.subr.mxu0 0.0
  %238 = vmatpush1.msra.mxu0 0.0
  %239 = vmatprep.subr.mxu0 0.0
  %240 = vmatpush1.msra.mxu0 0.0
  %241 = vmatprep.subr.mxu0 0.0
  %242 = vmatpush1.msra.mxu0 0.0
  %243 = vmatprep.subr.mxu0 0.0
  %244 = vmatpush1.msra.mxu0 0.0
  %245 = vmatprep.subr.mxu0 0.0
  %246 = vmatpush1.msra.mxu0 0.0
  %247 = vmatprep.subr.mxu0 0.0
  %248 = vmatpush1.msra.mxu0 0.0
  %249 = vmatprep.subr.mxu0 0.0
  %250 = vmatpush1.msra.mxu0 0.0
  %251 = vmatprep.subr.mxu0 0.0
  %252 = vmatpush1.msra.mxu0 0.0
  %253 = vmatprep.subr.mxu0 0.0
  %254 = vmatpush1.msra.mxu0 0.0
  %255 = vmatprep.subr.mxu0 0.0
  %256 = vmatpush1.msra.mxu0 0.0
  %257 = vmatprep.subr.mxu0 0.0
  %258 = vmatpush1.msra.mxu0 0.0
  %259 = vmatprep.mubr.f32.mxu0 0.0
  %260 = vmatmul.mubr.f32.gmra.mrb[0].mxu0 %v122
  %v261 = vpop.f32.mrb[0].mxu0
  %v262 = vadd.f32 %v111, %v261
  %v263 = vpop.f32.mrb[0].mxu0
  %v264 = vadd.f32 %v115, %v263
  %265 = vdwg.mxu0
  %v266 = vtanh.pop %v191
  %v267 = vtanh.pop %v193
  %v268 = vtanh.pop %v262
  %v269 = vtanh.pop %v264
  %270 = vmatprep.subr.mxu0 0.0
  %271 = vmatpush1.msra.mxu0 %v35
  %272 = vmatprep.subr.mxu0 0.0
  %273 = vmatpush1.msra.mxu0 %v36
  %274 = vmatprep.subr.mxu0 0.0
  %275 = vmatpush1.msra.mxu0 %v37
  %276 = vmatprep.subr.mxu0 0.0
  %277 = vmatpush1.msra.mxu0 %v38
  %278 = vmatprep.subr.mxu0 0.0
  %279 = vmatpush1.msra.mxu0 %v39
  %280 = vmatprep.subr.mxu0 0.0
  %281 = vmatpush1.msra.mxu0 %v40
  %282 = vmatprep.subr.mxu0 0.0
  %283 = vmatpush1.msra.mxu0 %v41
  %284 = vmatprep.subr.mxu0 0.0
  %285 = vmatpush1.msra.mxu0 %v42
  %286 = vmatprep.subr.mxu0 0.0
  %287 = vmatpush1.msra.mxu0 %v43
  %288 = vmatprep.subr.mxu0 0.0
  %289 = vmatpush1.msra.mxu0 %v44
  %290 = vmatprep.subr.mxu0 0.0
  %291 = vmatpush1.msra.mxu0 %v45
  %292 = vmatprep.subr.mxu0 0.0
  %293 = vmatpush1.msra.mxu0 %v46
  %294 = vmatprep.subr.mxu0 0.0
  %295 = vmatpush1.msra.mxu0 %v47
  %296 = vmatprep.subr.mxu0 0.0
  %297 = vmatpush1.msra.mxu0 %v48
  %298 = vmatprep.subr.mxu0 0.0
  %299 = vmatpush1.msra.mxu0 %v49
  %300 = vmatprep.subr.mxu0 0.0
  %301 = vmatpush1.msra.mxu0 %v50
  %302 = vmatprep.subr.mxu0 0.0
  %303 = vmatpush1.msra.mxu0 %v51
  %304 = vmatprep.subr.mxu0 0.0
  %305 = vmatpush1.msra.mxu0 %v52
  %306 = vmatprep.subr.mxu0 0.0
  %307 = vmatpush1.msra.mxu0 %v53
  %308 = vmatprep.subr.mxu0 0.0
  %309 = vmatpush1.msra.mxu0 %v54
  %310 = vmatprep.subr.mxu0 0.0
  %311 = vmatpush1.msra.mxu0 %v55
  %312 = vmatprep.subr.mxu0 0.0
  %313 = vmatpush1.msra.mxu0 %v56
  %314 = vmatprep.subr.mxu0 0.0
  %315 = vmatpush1.msra.mxu0 %v57
  %316 = vmatprep.subr.mxu0 0.0
  %317 = vmatpush1.msra.mxu0 %v58
  %318 = vmatprep.subr.mxu0 0.0
  %319 = vmatpush1.msra.mxu0 %v59
  %320 = vmatprep.subr.mxu0 0.0
  %321 = vmatpush1.msra.mxu0 %v60
  %322 = vmatprep.subr.mxu0 0.0
  %323 = vmatpush1.msra.mxu0 %v61
  %324 = vmatprep.subr.mxu0 0.0
  %325 = vmatpush1.msra.mxu0 %v62
  %326 = vmatprep.subr.mxu0 0.0
  %327 = vmatpush1.msra.mxu0 %v63
  %328 = vmatprep.subr.mxu0 0.0
  %329 = vmatpush1.msra.mxu0 %v64
  %330 = vmatprep.subr.mxu0 0.0
  %331 = vmatpush1.msra.mxu0 %v65
  %332 = vmatprep.subr.mxu0 0.0
  %333 = vmatpush1.msra.mxu0 %v66
  %334 = vmatprep.mubr.f32.mxu0 %v267
  %335 = vmatmul.mubr.f32.gmra.mrb[0].mxu0 %v266
  %v336 = vpop.f32.mrb[0].mxu0
  %v337 = vadd.f32 0.0, %v336
  %v338 = vpop.f32.mrb[0].mxu0
  %339 = vdwg.mxu0
  %340 = vmatprep.subr.mxu0 0.0
  %341 = vmatpush1.msra.mxu0 %v67
  %342 = vmatprep.subr.mxu0 0.0
  %343 = vmatpush1.msra.mxu0 %v68
  %344 = vmatprep.subr.mxu0 0.0
  %345 = vmatpush1.msra.mxu0 %v69
  %346 = vmatprep.subr.mxu0 0.0
  %347 = vmatpush1.msra.mxu0 %v70
  %348 = vmatprep.subr.mxu0 0.0
  %349 = vmatpush1.msra.mxu0 %v71
  %350 = vmatprep.subr.mxu0 0.0
  %351 = vmatpush1.msra.mxu0 %v72
  %352 = vmatprep.subr.mxu0 0.0
  %353 = vmatpush1.msra.mxu0 %v73
  %354 = vmatprep.subr.mxu0 0.0
  %355 = vmatpush1.msra.mxu0 %v74
  %356 = vmatprep.subr.mxu0 0.0
  %357 = vmatpush1.msra.mxu0 %v75
  %358 = vmatprep.subr.mxu0 0.0
  %359 = vmatpush1.msra.mxu0 %v76
  %360 = vmatprep.subr.mxu0 0.0
  %361 = vmatpush1.msra.mxu0 %v77
  %362 = vmatprep.subr.mxu0 0.0
  %363 = vmatpush1.msra.mxu0 %v78
  %364 = vmatprep.subr.mxu0 0.0
  %365 = vmatpush1.msra.mxu0 %v79
  %366 = vmatprep.subr.mxu0 0.0
  %367 = vmatpush1.msra.mxu0 %v80
  %368 = vmatprep.subr.mxu0 0.0
  %369 = vmatpush1.msra.mxu0 %v81
  %370 = vmatprep.subr.mxu0 0.0
  %371 = vmatpush1.msra.mxu0 %v82
  %372 = vmatprep.subr.mxu0 0.0
  %373 = vmatpush1.msra.mxu0 %v83
  %374 = vmatprep.subr.mxu0 0.0
  %375 = vmatpush1.msra.mxu0 %v84
  %376 = vmatprep.subr.mxu0 0.0
  %377 = vmatpush1.msra.mxu0 %v85
  %378 = vmatprep.subr.mxu0 0.0
  %379 = vmatpush1.msra.mxu0 %v86
  %380 = vmatprep.subr.mxu0 0.0
  %381 = vmatpush1.msra.mxu0 %v87
  %382 = vmatprep.subr.mxu0 0.0
  %383 = vmatpush1.msra.mxu0 %v88
  %384 = vmatprep.subr.mxu0 0.0
  %385 = vmatpush1.msra.mxu0 %v89
  %386 = vmatprep.subr.mxu0 0.0
  %387 = vmatpush1.msra.mxu0 %v90
  %388 = vmatprep.subr.mxu0 0.0
  %389 = vmatpush1.msra.mxu0 %v91
  %390 = vmatprep.subr.mxu0 0.0
  %391 = vmatpush1.msra.mxu0 %v92
  %392 = vmatprep.subr.mxu0 0.0
  %393 = vmatpush1.msra.mxu0 %v93
  %394 = vmatprep.subr.mxu0 0.0
  %395 = vmatpush1.msra.mxu0 %v94
  %396 = vmatprep.subr.mxu0 0.0
  %397 = vmatpush1.msra.mxu0 %v95
  %398 = vmatprep.subr.mxu0 0.0
  %399 = vmatpush1.msra.mxu0 %v96
  %400 = vmatprep.subr.mxu0 0.0
  %401 = vmatpush1.msra.mxu0 %v97
  %402 = vmatprep.subr.mxu0 0.0
  %403 = vmatpush1.msra.mxu0 %v98
  %404 = vmatprep.mubr.f32.mxu0 %v269
  %405 = vmatmul.mubr.f32.gmra.mrb[0].mxu0 %v268
  %v406 = vpop.f32.mrb[0].mxu0
  %v407 = vadd.f32 %v337, %v406
  %v408 = vpop.f32.mrb[0].mxu0
  %409 = vdwg.mxu0
  %vm410 = vcmask 257024
  %411 = vst.msk [vmem:[%s4] sm:$0xf] %vm410, %v407
  // Predicated region
  $region18: #{attention_layer.2} parent=0 // pred_check
    _
  $region19: #{attention_layer.2} parent=0 // pred_check_branch
    %413 = sbr.rel (0) target = $region21
  $region20: #{attention_layer.2} parent=0 // pred_region
    _
  $region21: #{attention_layer.2} parent=0 // pred_fallthru
    _
  // Predicated region
  $region22: #{attention_layer.2} parent=0 // pred_check
    _
  $region23: #{attention_layer.2} parent=0 // pred_check_branch
    %415 = sbr.rel (0) target = $region25
  $region24: #{attention_layer.2} parent=0 // pred_region
    _
  $region25: #{attention_layer.2} parent=0 // pred_fallthru
    _

</llo_original>
